<compile_context>
chip_gen: v7x
topology: tpu7x:2x2x1
jax: 0.10.0
libtpu: 0.0.40
codegen_flags: <defaults>
</compile_context>

<pallas_src>
import math

import jax
import jax.numpy as jnp
import numpy as np
from jax.experimental import pallas as pl
from jax.experimental.pallas import tpu as pltpu

# ---------------- model hyper-parameters (small, deterministic) -------------
B = 2          # batch
S = 8          # sequence length
D_MODEL = 32   # d_model
H = 4          # heads
D_K = D_MODEL // H          # 8
D_FF = 64      # feed-forward hidden
EPS = 1e-6
BS = B * S                  # 16 folded (batch*seq) rows
HBS = H * BS                # 64 head-stacked score rows

# -------- packed parameter-slab layout (one DMA instead of eight) -----------
# Every tensor starts at lane 0 and on an 8-aligned row.
P_LANES = 128
R_WQK = 0      # (D_MODEL, 2*D_MODEL)  fused [wq * 1/sqrt(d_k) | wk]
R_BQK = 32     # (1, 2*D_MODEL)
R_W1 = 40      # (D_MODEL, D_FF)
R_B1 = 72      # (1, D_FF)
R_WVO = 80     # (D_MODEL, H*D_MODEL)  per-head folded  wv_h @ wo_h
R_BVO = 112    # (1, H*D_MODEL)        per-head folded  bv_h @ wo_h
R_W2 = 120     # (D_FF, D_MODEL)
R_B2 = 184     # (1, D_MODEL)
R_HMSK = 192   # (H*BS, D_MODEL)       0/1 per-head lane mask for stacked Q
R_BO = 256     # (1, D_MODEL)
P_ROWS = 264


def _encoder_block_kernel(ln_ref,   # SMEM (4,) [alpha1, bias1, alpha2, bias2]
                          p_ref,    # (P_ROWS, 128) packed parameter slab
                          x_ref,    # (BS, D_MODEL)
                          mb_ref,   # (HBS, BS) additive mask bias, head-tiled
                          o_ref):   # (BS, D_MODEL)
    x = x_ref[...]                           # (16, 32)
    mb = mb_ref[...]                         # (64, 16)

    alpha1 = ln_ref[0]
    beta1 = ln_ref[1]
    alpha2 = ln_ref[2]
    beta2 = ln_ref[3]

    def layer_norm(v, alpha, beta):
        # PyTorch: mean(dim=-1), std(dim=-1) with Bessel correction (N-1),
        # then alpha * (v - mean) / (std + eps) + beta   (alpha, beta scalars)
        mean = jnp.mean(v, axis=-1, keepdims=True)
        var = jnp.sum((v - mean) ** 2, axis=-1, keepdims=True) * (
            1.0 / (D_MODEL - 1))
        inv = pl.reciprocal(jnp.sqrt(var) + EPS)    # exact: feeds everything
        return alpha * (v - mean) * inv + beta

    # ---------------- residual connection 0: self attention -----------------
    xn = layer_norm(x, alpha1, beta1)                                  # (16,32)

    # fused Q/K projection (1/sqrt(d_k) pre-folded into the Q columns)
    wqk = p_ref[R_WQK:R_WQK + D_MODEL, 0:2 * D_MODEL]                  # (32,64)
    bqk = p_ref[R_BQK:R_BQK + 1, 0:2 * D_MODEL]                        # (1,64)
    qk = jnp.dot(xn, wqk, preferred_element_type=jnp.float32) + bqk    # (16,64)
    q = qk[:, 0:D_MODEL]
    k = qk[:, D_MODEL:2 * D_MODEL]

    # fused V+output projection: vo[:, 32h:32h+32] = xn @ (wv_h@wo_h) + bv_h@wo_h
    wvo = p_ref[R_WVO:R_WVO + D_MODEL, :]                              # (32,128)
    bvo = p_ref[R_BVO:R_BVO + 1, :]                                    # (1,128)
    vo = jnp.dot(xn, wvo, preferred_element_type=jnp.float32) + bvo    # (16,128)

    # All-head scores with ONE contraction (one K transpose instead of four):
    # stack Q over heads on the sublane axis, zero non-head lanes.
    hmask = p_ref[R_HMSK:R_HMSK + HBS, 0:D_MODEL]                      # (64,32)
    q_stack = jnp.tile(q, (H, 1)) * hmask                              # (64,32)
    s = jnp.einsum('qd,kd->qk', q_stack, k,
                   preferred_element_type=jnp.float32) + mb            # (64,16)

    # Single merged softmax across all 4 heads (one max/exp/sum/rcp chain).
    # TODO(synk): a row whose keys are ALL masked would fall back to a uniform
    # distribution over the whole folded row (unlike per-batch torch softmax);
    # unreachable with padding-style masks like the one tested below.
    smax = jnp.max(s, axis=-1, keepdims=True)
    e = jnp.exp(s - smax)
    denom = jnp.sum(e, axis=-1, keepdims=True)
    r = pl.reciprocal(denom, approx=True)      # EUP vrcp
    r = r * (2.0 - denom * r)                  # one Newton step -> f32 accuracy
    p = e * r                                                          # (64,16)

    # per-head  p_h @ (v_h @ wo_h)  accumulated -> no lane-axis concat and no
    # separate output-projection matmul stage.
    bo = p_ref[R_BO:R_BO + 1, 0:D_MODEL]                               # (1,32)
    head = [
        jnp.dot(p[h * BS:(h + 1) * BS, :],
                vo[:, h * D_MODEL:(h + 1) * D_MODEL],
                preferred_element_type=jnp.float32)
        for h in range(H)
    ]
    attn_out = (head[0] + head[1]) + (head[2] + head[3]) + bo          # (16,32)
    x1 = x + attn_out                                                  # residual

    # ---------------- residual connection 1: feed forward -------------------
    # TODO(synk): dropout layers are identity (eval mode); no in-kernel RNG.
    x1n = layer_norm(x1, alpha2, beta2)
    w1 = p_ref[R_W1:R_W1 + D_MODEL, 0:D_FF]
    b1 = p_ref[R_B1:R_B1 + 1, 0:D_FF]
    hdn = jnp.maximum(
        jnp.dot(x1n, w1, preferred_element_type=jnp.float32) + b1, 0.0)
    w2 = p_ref[R_W2:R_W2 + D_FF, 0:D_MODEL]
    b2 = p_ref[R_B2:R_B2 + 1, 0:D_MODEL]
    ffn = jnp.dot(hdn, w2, preferred_element_type=jnp.float32) + b2

    o_ref[...] = (x1 + ffn).astype(o_ref.dtype)


def encoder_block(x, mask, fused_params):
    """x: (B, S, D) f32, mask: (B, S, S) f32. Returns (B, S, D) f32."""
    ln, pslab = fused_params
    x2 = x.reshape(BS, D_MODEL)

    # Additive mask bias, block-diagonal over batch (cross-batch scores get
    # -1e20 -> weight 0 so one (BS, BS) score matrix per head serves both
    # batch elements), pre-tiled over heads for the merged softmax.
    mask_bias = jnp.where(mask == 0, jnp.float32(-1e20), jnp.float32(0.0))
    big = jnp.full((BS, BS), jnp.float32(-1e20))
    for b in range(B):
        big = jax.lax.dynamic_update_slice(big, mask_bias[b], (b * S, b * S))
    mb_tiled = jnp.tile(big, (H, 1))                                   # (64,16)

    grid_spec = pltpu.PrefetchScalarGridSpec(
        num_scalar_prefetch=1,               # LN scalars land in SMEM
        grid=(1,),                           # everything VMEM-resident, 1 step
        in_specs=[
            pl.BlockSpec((P_ROWS, P_LANES), lambda i, ln: (0, 0)),     # params
            pl.BlockSpec((BS, D_MODEL), lambda i, ln: (0, 0)),         # x
            pl.BlockSpec((HBS, BS), lambda i, ln: (0, 0)),             # mask bias
        ],
        out_specs=pl.BlockSpec((BS, D_MODEL), lambda i, ln: (0, 0)),
    )

    out2 = pl.pallas_call(
        _encoder_block_kernel,
        out_shape=jax.ShapeDtypeStruct((BS, D_MODEL), jnp.float32),
        grid_spec=grid_spec,
        compiler_params=pltpu.CompilerParams(
            dimension_semantics=("arbitrary",)),   # one step, one TensorCore
    )(ln, pslab, x2, mb_tiled)

    return out2.reshape(B, S, D_MODEL)


def fuse_params(params):
    """One-time host-side parameter transform.

    * folds 1/sqrt(d_k) into wq/bq and fuses the Q,K projections,
    * folds each head's V projection into the output projection
      (Wvo_h = wv_h @ wo_h, bvo_h = bv_h @ wo_h),
    * builds the 0/1 per-head lane mask used to stack Q over heads,
    * packs all weights/biases/constants into ONE (P_ROWS, 128) slab so the
      kernel issues a single parameter DMA instead of eight.
    """
    (ln, wq, bq, wk, bk, wv, bv, wo, bo, w1, b1, w2, b2) = [
        np.asarray(p, np.float32) for p in params]
    scale = np.float32(1.0 / math.sqrt(D_K))

    slab = np.zeros((P_ROWS, P_LANES), np.float32)
    slab[R_WQK:R_WQK + D_MODEL, 0:D_MODEL] = wq * scale
    slab[R_WQK:R_WQK + D_MODEL, D_MODEL:2 * D_MODEL] = wk
    slab[R_BQK, 0:D_MODEL] = bq[0] * scale
    slab[R_BQK, D_MODEL:2 * D_MODEL] = bk[0]
    slab[R_W1:R_W1 + D_MODEL, 0:D_FF] = w1
    slab[R_B1, 0:D_FF] = b1[0]
    for h in range(H):
        wv_h = wv[:, h * D_K:(h + 1) * D_K]          # (32, 8)
        bv_h = bv[:, h * D_K:(h + 1) * D_K]          # (1, 8)
        wo_h = wo[h * D_K:(h + 1) * D_K, :]          # (8, 32)
        slab[R_WVO:R_WVO + D_MODEL,
             h * D_MODEL:(h + 1) * D_MODEL] = wv_h @ wo_h
        slab[R_BVO, h * D_MODEL:(h + 1) * D_MODEL] = (bv_h @ wo_h)[0]
        slab[R_HMSK + h * BS:R_HMSK + (h + 1) * BS,
             h * D_K:(h + 1) * D_K] = 1.0
    slab[R_W2:R_W2 + D_FF, 0:D_MODEL] = w2
    slab[R_B2, 0:D_MODEL] = b2[0]
    slab[R_BO, 0:D_MODEL] = bo[0]

    return (jnp.asarray(ln), jnp.asarray(slab))


# ----------------------------- pure-JAX reference ----------------------------
def _layer_norm_ref(v, alpha, bias):
    mean = jnp.mean(v, axis=-1, keepdims=True)
    var = jnp.sum((v - mean) ** 2, axis=-1, keepdims=True) / (v.shape[-1] - 1)
    std = jnp.sqrt(var)
    return alpha * (v - mean) / (std + EPS) + bias


def encoder_block_ref(x, mask, params):
    (ln, wq, bq, wk, bk, wv, bv, wo, bo, w1, b1, w2, b2) = params
    a1, bi1, a2, bi2 = ln[0], ln[1], ln[2], ln[3]

    xn = _layer_norm_ref(x, a1, bi1)
    q = xn @ wq + bq
    k = xn @ wk + bk
    v = xn @ wv + bv
    qh = q.reshape(B, S, H, D_K).transpose(0, 2, 1, 3)
    kh = k.reshape(B, S, H, D_K).transpose(0, 2, 1, 3)
    vh = v.reshape(B, S, H, D_K).transpose(0, 2, 1, 3)
    scores = (qh @ kh.transpose(0, 1, 3, 2)) / math.sqrt(D_K)
    scores = jnp.where(mask[:, None, :, :] == 0, -1e20, scores)
    p = jax.nn.softmax(scores, axis=-1)
    attn = (p @ vh).transpose(0, 2, 1, 3).reshape(B, S, D_MODEL)
    x1 = x + (attn @ wo + bo)

    x1n = _layer_norm_ref(x1, a2, bi2)
    ffn = jnp.maximum(x1n @ w1 + b1, 0.0) @ w2 + b2
    return x1 + ffn


# --------------------------------- main --------------------------------------
if __name__ == "__main__":
    key = jax.random.PRNGKey(0)
    keys = jax.random.split(key, 16)

    def init(k, shape, fan_in):
        bound = 1.0 / math.sqrt(fan_in)
        return jax.random.uniform(k, shape, jnp.float32, -bound, bound)

    # Weights stored pre-transposed vs. torch (in_features, out_features) so
    # the kernel computes  y = x @ W + b  (== torch x @ W_torch.T + b).
    wq = init(keys[0], (D_MODEL, D_MODEL), D_MODEL)
    bq = init(keys[1], (1, D_MODEL), D_MODEL)
    wk = init(keys[2], (D_MODEL, D_MODEL), D_MODEL)
    bk = init(keys[3], (1, D_MODEL), D_MODEL)
    wv = init(keys[4], (D_MODEL, D_MODEL), D_MODEL)
    bv = init(keys[5], (1, D_MODEL), D_MODEL)
    wo = init(keys[6], (D_MODEL, D_MODEL), D_MODEL)
    bo = init(keys[7], (1, D_MODEL), D_MODEL)
    w1 = init(keys[8], (D_MODEL, D_FF), D_MODEL)
    b1 = init(keys[9], (1, D_FF), D_MODEL)
    w2 = init(keys[10], (D_FF, D_MODEL), D_FF)
    b2 = init(keys[11], (1, D_MODEL), D_FF)

    # LayerNormalisation params: alpha=1, bias=0 (module default init).
    ln = jnp.array([1.0, 0.0, 1.0, 0.0], dtype=jnp.float32)

    params = (ln, wq, bq, wk, bk, wv, bv, wo, bo, w1, b1, w2, b2)
    fused = fuse_params(params)      # one-time host-side weight transform

    x = jax.random.normal(keys[12], (B, S, D_MODEL), jnp.float32)
    # A padding-style mask: last two key positions of batch 1 are masked out.
    mask = jnp.ones((B, S, S), jnp.float32)
    mask = mask.at[1, :, S - 2:].set(0.0)

    out = encoder_block(x, mask, fused)
    out = jax.block_until_ready(out)

    ref = encoder_block_ref(x, mask, params)
    np.testing.assert_allclose(np.asarray(out), np.asarray(ref),
                               rtol=1e-4, atol=1e-4)
    print("KERNEL_OK")
</pallas_src>

<mosaic_0001>
module attributes {stable_mosaic.version = 11 : i64} {
  func.func @_encoder_block_kernel(%arg0: i32, %arg1: memref<4xf32, #tpu.memory_space<smem>>, %arg2: memref<264x128xf32, #tpu.memory_space<vmem>>, %arg3: memref<16x32xf32, #tpu.memory_space<vmem>>, %arg4: memref<64x16xf32, #tpu.memory_space<vmem>>, %arg5: memref<16x32xf32, #tpu.memory_space<vmem>>) attributes {dimension_semantics = [#tpu.dimension_semantics<arbitrary>], iteration_bounds = array<i64: 1>, scalar_prefetch = 1 : i64, scratch_operands = 0 : i64, tpu.core_type = #tpu.core_type<tc>, window_params = [{pipeline_mode = #tpu.pipeline_mode<synchronous>, transform_indices = @transform_0, window_bounds = array<i64: 264, 128>}, {pipeline_mode = #tpu.pipeline_mode<synchronous>, transform_indices = @transform_1, window_bounds = array<i64: 16, 32>}, {pipeline_mode = #tpu.pipeline_mode<synchronous>, transform_indices = @transform_2, window_bounds = array<i64: 64, 16>}, {pipeline_mode = #tpu.pipeline_mode<synchronous>, transform_indices = @transform_3, window_bounds = array<i64: 16, 32>}]} {
    %c0 = arith.constant 0 : index
    %c0_0 = arith.constant 0 : index
    %0 = vector.load %arg3[%c0, %c0_0] : memref<16x32xf32, #tpu.memory_space<vmem>>, vector<16x32xf32>
    %c0_1 = arith.constant 0 : index
    %c0_2 = arith.constant 0 : index
    %1 = vector.load %arg4[%c0_1, %c0_2] : memref<64x16xf32, #tpu.memory_space<vmem>>, vector<64x16xf32>
    %c0_3 = arith.constant 0 : index
    %2 = memref.load %arg1[%c0_3] : memref<4xf32, #tpu.memory_space<smem>>
    %c1 = arith.constant 1 : index
    %3 = memref.load %arg1[%c1] : memref<4xf32, #tpu.memory_space<smem>>
    %c2 = arith.constant 2 : index
    %4 = memref.load %arg1[%c2] : memref<4xf32, #tpu.memory_space<smem>>
    %c3 = arith.constant 3 : index
    %5 = memref.load %arg1[%c3] : memref<4xf32, #tpu.memory_space<smem>>
    %cst = arith.constant dense<0.000000e+00> : vector<16xf32>
    %6 = vector.multi_reduction <add>, %0, %cst [1] : vector<16x32xf32> to vector<16xf32>
    %7 = vector.shape_cast %6 : vector<16xf32> to vector<16x1xf32>
    %cst_4 = arith.constant 3.200000e+01 : f32
    %8 = vector.broadcast %cst_4 : f32 to vector<16x1xf32>
    %9 = arith.divf %7, %8 : vector<16x1xf32>
    %10 = vector.broadcast %9 : vector<16x1xf32> to vector<16x32xf32>
    %11 = arith.subf %0, %10 : vector<16x32xf32>
    %12 = arith.mulf %11, %11 : vector<16x32xf32>
    %cst_5 = arith.constant dense<0.000000e+00> : vector<16xf32>
    %13 = vector.multi_reduction <add>, %12, %cst_5 [1] : vector<16x32xf32> to vector<16xf32>
    %14 = vector.shape_cast %13 : vector<16xf32> to vector<16x1xf32>
    %cst_6 = arith.constant 0.0322580636 : f32
    %15 = vector.broadcast %cst_6 : f32 to vector<16x1xf32>
    %16 = arith.mulf %14, %15 : vector<16x1xf32>
    %17 = math.sqrt %16 : vector<16x1xf32>
    %cst_7 = arith.constant 9.99999997E-7 : f32
    %18 = vector.broadcast %cst_7 : f32 to vector<16x1xf32>
    %19 = arith.addf %17, %18 : vector<16x1xf32>
    %20 = tpu.reciprocal %19 : vector<16x1xf32> -> vector<16x1xf32>
    %21 = vector.broadcast %9 : vector<16x1xf32> to vector<16x32xf32>
    %22 = arith.subf %0, %21 : vector<16x32xf32>
    %23 = vector.broadcast %2 : f32 to vector<16x32xf32>
    %24 = arith.mulf %23, %22 : vector<16x32xf32>
    %25 = vector.broadcast %20 : vector<16x1xf32> to vector<16x32xf32>
    %26 = arith.mulf %24, %25 : vector<16x32xf32>
    %27 = vector.broadcast %3 : f32 to vector<16x32xf32>
    %28 = arith.addf %26, %27 : vector<16x32xf32>
    %c0_8 = arith.constant 0 : index
    %c0_9 = arith.constant 0 : index
    %29 = vector.load %arg2[%c0_8, %c0_9] : memref<264x128xf32, #tpu.memory_space<vmem>>, vector<32x64xf32>
    %c32 = arith.constant 32 : index
    %c0_10 = arith.constant 0 : index
    %30 = vector.load %arg2[%c32, %c0_10] : memref<264x128xf32, #tpu.memory_space<vmem>>, vector<1x64xf32>
    %cst_11 = arith.constant dense<0.000000e+00> : vector<16x64xf32>
    %31 = tpu.matmul %28, %29, %cst_11 {dimension_numbers = #tpu.dot_dimension_numbers<[1], [0], [0], [1], [0, 0, 1, 1], [], []>} : vector<16x32xf32>, vector<32x64xf32>, vector<16x64xf32> -> vector<16x64xf32>
    %32 = vector.broadcast %30 : vector<1x64xf32> to vector<16x64xf32>
    %33 = arith.addf %31, %32 : vector<16x64xf32>
    %34 = vector.extract_strided_slice %33 {offsets = [0, 0], sizes = [16, 32], strides = [1, 1]} : vector<16x64xf32> to vector<16x32xf32>
    %35 = vector.extract_strided_slice %33 {offsets = [0, 32], sizes = [16, 32], strides = [1, 1]} : vector<16x64xf32> to vector<16x32xf32>
    %c80 = arith.constant 80 : index
    %c0_12 = arith.constant 0 : index
    %36 = vector.load %arg2[%c80, %c0_12] : memref<264x128xf32, #tpu.memory_space<vmem>>, vector<32x128xf32>
    %c112 = arith.constant 112 : index
    %c0_13 = arith.constant 0 : index
    %37 = vector.load %arg2[%c112, %c0_13] : memref<264x128xf32, #tpu.memory_space<vmem>>, vector<1x128xf32>
    %cst_14 = arith.constant dense<0.000000e+00> : vector<16x128xf32>
    %38 = tpu.matmul %28, %36, %cst_14 {dimension_numbers = #tpu.dot_dimension_numbers<[1], [0], [0], [1], [0, 0, 1, 1], [], []>} : vector<16x32xf32>, vector<32x128xf32>, vector<16x128xf32> -> vector<16x128xf32>
    %39 = vector.broadcast %37 : vector<1x128xf32> to vector<16x128xf32>
    %40 = arith.addf %38, %39 : vector<16x128xf32>
    %c192 = arith.constant 192 : index
    %c0_15 = arith.constant 0 : index
    %41 = vector.load %arg2[%c192, %c0_15] : memref<264x128xf32, #tpu.memory_space<vmem>>, vector<64x32xf32>
    %42 = tpu.concatenate %34, %34, %34, %34 in 0 : vector<16x32xf32>, vector<16x32xf32>, vector<16x32xf32>, vector<16x32xf32> -> vector<64x32xf32>
    %43 = arith.mulf %42, %41 : vector<64x32xf32>
    "tpu.trace_start"() <{level = 10 : i32, message = "qd,kd->qk"}> : () -> ()
    %cst_16 = arith.constant dense<0.000000e+00> : vector<64x16xf32>
    %44 = tpu.matmul %43, %35, %cst_16 {dimension_numbers = #tpu.dot_dimension_numbers<[1], [1], [0], [0], [0, 0, 1, 0], [], []>} : vector<64x32xf32>, vector<16x32xf32>, vector<64x16xf32> -> vector<64x16xf32>
    "tpu.trace_stop"() : () -> ()
    %45 = arith.addf %44, %1 : vector<64x16xf32>
    %cst_17 = arith.constant dense<0xFF800000> : vector<64xf32>
    %46 = vector.multi_reduction <maximumf>, %45, %cst_17 [1] : vector<64x16xf32> to vector<64xf32>
    %47 = vector.shape_cast %46 : vector<64xf32> to vector<64x1xf32>
    %48 = vector.broadcast %47 : vector<64x1xf32> to vector<64x16xf32>
    %49 = arith.subf %45, %48 : vector<64x16xf32>
    %50 = math.exp %49 : vector<64x16xf32>
    %cst_18 = arith.constant dense<0.000000e+00> : vector<64xf32>
    %51 = vector.multi_reduction <add>, %50, %cst_18 [1] : vector<64x16xf32> to vector<64xf32>
    %52 = vector.shape_cast %51 : vector<64xf32> to vector<64x1xf32>
    %53 = tpu.reciprocal %52 {approx = true} : vector<64x1xf32> -> vector<64x1xf32>
    %54 = arith.mulf %52, %53 : vector<64x1xf32>
    %cst_19 = arith.constant 2.000000e+00 : f32
    %55 = vector.broadcast %cst_19 : f32 to vector<64x1xf32>
    %56 = arith.subf %55, %54 : vector<64x1xf32>
    %57 = arith.mulf %53, %56 : vector<64x1xf32>
    %58 = vector.broadcast %57 : vector<64x1xf32> to vector<64x16xf32>
    %59 = arith.mulf %50, %58 : vector<64x16xf32>
    %c256 = arith.constant 256 : index
    %c0_20 = arith.constant 0 : index
    %60 = vector.load %arg2[%c256, %c0_20] : memref<264x128xf32, #tpu.memory_space<vmem>>, vector<1x32xf32>
    %61 = vector.extract_strided_slice %59 {offsets = [0, 0], sizes = [16, 16], strides = [1, 1]} : vector<64x16xf32> to vector<16x16xf32>
    %62 = vector.extract_strided_slice %40 {offsets = [0, 0], sizes = [16, 32], strides = [1, 1]} : vector<16x128xf32> to vector<16x32xf32>
    %cst_21 = arith.constant dense<0.000000e+00> : vector<16x32xf32>
    %63 = tpu.matmul %61, %62, %cst_21 {dimension_numbers = #tpu.dot_dimension_numbers<[1], [0], [0], [1], [0, 0, 1, 1], [], []>} : vector<16x16xf32>, vector<16x32xf32>, vector<16x32xf32> -> vector<16x32xf32>
    %64 = vector.extract_strided_slice %59 {offsets = [16, 0], sizes = [16, 16], strides = [1, 1]} : vector<64x16xf32> to vector<16x16xf32>
    %65 = vector.extract_strided_slice %40 {offsets = [0, 32], sizes = [16, 32], strides = [1, 1]} : vector<16x128xf32> to vector<16x32xf32>
    %cst_22 = arith.constant dense<0.000000e+00> : vector<16x32xf32>
    %66 = tpu.matmul %64, %65, %cst_22 {dimension_numbers = #tpu.dot_dimension_numbers<[1], [0], [0], [1], [0, 0, 1, 1], [], []>} : vector<16x16xf32>, vector<16x32xf32>, vector<16x32xf32> -> vector<16x32xf32>
    %67 = vector.extract_strided_slice %59 {offsets = [32, 0], sizes = [16, 16], strides = [1, 1]} : vector<64x16xf32> to vector<16x16xf32>
    %68 = vector.extract_strided_slice %40 {offsets = [0, 64], sizes = [16, 32], strides = [1, 1]} : vector<16x128xf32> to vector<16x32xf32>
    %cst_23 = arith.constant dense<0.000000e+00> : vector<16x32xf32>
    %69 = tpu.matmul %67, %68, %cst_23 {dimension_numbers = #tpu.dot_dimension_numbers<[1], [0], [0], [1], [0, 0, 1, 1], [], []>} : vector<16x16xf32>, vector<16x32xf32>, vector<16x32xf32> -> vector<16x32xf32>
    %70 = vector.extract_strided_slice %59 {offsets = [48, 0], sizes = [16, 16], strides = [1, 1]} : vector<64x16xf32> to vector<16x16xf32>
    %71 = vector.extract_strided_slice %40 {offsets = [0, 96], sizes = [16, 32], strides = [1, 1]} : vector<16x128xf32> to vector<16x32xf32>
    %cst_24 = arith.constant dense<0.000000e+00> : vector<16x32xf32>
    %72 = tpu.matmul %70, %71, %cst_24 {dimension_numbers = #tpu.dot_dimension_numbers<[1], [0], [0], [1], [0, 0, 1, 1], [], []>} : vector<16x16xf32>, vector<16x32xf32>, vector<16x32xf32> -> vector<16x32xf32>
    %73 = arith.addf %63, %66 : vector<16x32xf32>
    %74 = arith.addf %69, %72 : vector<16x32xf32>
    %75 = arith.addf %73, %74 : vector<16x32xf32>
    %76 = vector.broadcast %60 : vector<1x32xf32> to vector<16x32xf32>
    %77 = arith.addf %75, %76 : vector<16x32xf32>
    %78 = arith.addf %0, %77 : vector<16x32xf32>
    %cst_25 = arith.constant dense<0.000000e+00> : vector<16xf32>
    %79 = vector.multi_reduction <add>, %78, %cst_25 [1] : vector<16x32xf32> to vector<16xf32>
    %80 = vector.shape_cast %79 : vector<16xf32> to vector<16x1xf32>
    %cst_26 = arith.constant 3.200000e+01 : f32
    %81 = vector.broadcast %cst_26 : f32 to vector<16x1xf32>
    %82 = arith.divf %80, %81 : vector<16x1xf32>
    %83 = vector.broadcast %82 : vector<16x1xf32> to vector<16x32xf32>
    %84 = arith.subf %78, %83 : vector<16x32xf32>
    %85 = arith.mulf %84, %84 : vector<16x32xf32>
    %cst_27 = arith.constant dense<0.000000e+00> : vector<16xf32>
    %86 = vector.multi_reduction <add>, %85, %cst_27 [1] : vector<16x32xf32> to vector<16xf32>
    %87 = vector.shape_cast %86 : vector<16xf32> to vector<16x1xf32>
    %cst_28 = arith.constant 0.0322580636 : f32
    %88 = vector.broadcast %cst_28 : f32 to vector<16x1xf32>
    %89 = arith.mulf %87, %88 : vector<16x1xf32>
    %90 = math.sqrt %89 : vector<16x1xf32>
    %cst_29 = arith.constant 9.99999997E-7 : f32
    %91 = vector.broadcast %cst_29 : f32 to vector<16x1xf32>
    %92 = arith.addf %90, %91 : vector<16x1xf32>
    %93 = tpu.reciprocal %92 : vector<16x1xf32> -> vector<16x1xf32>
    %94 = vector.broadcast %82 : vector<16x1xf32> to vector<16x32xf32>
    %95 = arith.subf %78, %94 : vector<16x32xf32>
    %96 = vector.broadcast %4 : f32 to vector<16x32xf32>
    %97 = arith.mulf %96, %95 : vector<16x32xf32>
    %98 = vector.broadcast %93 : vector<16x1xf32> to vector<16x32xf32>
    %99 = arith.mulf %97, %98 : vector<16x32xf32>
    %100 = vector.broadcast %5 : f32 to vector<16x32xf32>
    %101 = arith.addf %99, %100 : vector<16x32xf32>
    %c40 = arith.constant 40 : index
    %c0_30 = arith.constant 0 : index
    %102 = vector.load %arg2[%c40, %c0_30] : memref<264x128xf32, #tpu.memory_space<vmem>>, vector<32x64xf32>
    %c72 = arith.constant 72 : index
    %c0_31 = arith.constant 0 : index
    %103 = vector.load %arg2[%c72, %c0_31] : memref<264x128xf32, #tpu.memory_space<vmem>>, vector<1x64xf32>
    %cst_32 = arith.constant dense<0.000000e+00> : vector<16x64xf32>
    %104 = tpu.matmul %101, %102, %cst_32 {dimension_numbers = #tpu.dot_dimension_numbers<[1], [0], [0], [1], [0, 0, 1, 1], [], []>} : vector<16x32xf32>, vector<32x64xf32>, vector<16x64xf32> -> vector<16x64xf32>
    %105 = vector.broadcast %103 : vector<1x64xf32> to vector<16x64xf32>
    %106 = arith.addf %104, %105 : vector<16x64xf32>
    %cst_33 = arith.constant 0.000000e+00 : f32
    %107 = vector.broadcast %cst_33 : f32 to vector<16x64xf32>
    %108 = arith.maximumf %106, %107 : vector<16x64xf32>
    %c120 = arith.constant 120 : index
    %c0_34 = arith.constant 0 : index
    %109 = vector.load %arg2[%c120, %c0_34] : memref<264x128xf32, #tpu.memory_space<vmem>>, vector<64x32xf32>
    %c184 = arith.constant 184 : index
    %c0_35 = arith.constant 0 : index
    %110 = vector.load %arg2[%c184, %c0_35] : memref<264x128xf32, #tpu.memory_space<vmem>>, vector<1x32xf32>
    %cst_36 = arith.constant dense<0.000000e+00> : vector<16x32xf32>
    %111 = tpu.matmul %108, %109, %cst_36 {dimension_numbers = #tpu.dot_dimension_numbers<[1], [0], [0], [1], [0, 0, 1, 1], [], []>} : vector<16x64xf32>, vector<64x32xf32>, vector<16x32xf32> -> vector<16x32xf32>
    %112 = vector.broadcast %110 : vector<1x32xf32> to vector<16x32xf32>
    %113 = arith.addf %111, %112 : vector<16x32xf32>
    %114 = arith.addf %78, %113 : vector<16x32xf32>
    %c0_37 = arith.constant 0 : index
    %c0_38 = arith.constant 0 : index
    %115 = vector.load %arg5[%c0_37, %c0_38] : memref<16x32xf32, #tpu.memory_space<vmem>>, vector<16x32xf32>
    tpu.vector_store %arg5[%c0_37, %c0_38], %114 {strides = array<i32>} : memref<16x32xf32, #tpu.memory_space<vmem>>, vector<16x32xf32>,
    return
  }
  func.func @transform_0(%arg0: i32, %arg1: memref<4xf32, #tpu.memory_space<smem>>) -> (i32, i32) {
    %c0_i32 = arith.constant 0 : i32
    %c0_i32_0 = arith.constant 0 : i32
    %c0_i32_1 = arith.constant 0 : i32
    return %c0_i32, %c0_i32_0 : i32, i32
  }
  func.func @transform_1(%arg0: i32, %arg1: memref<4xf32, #tpu.memory_space<smem>>) -> (i32, i32) {
    %c0_i32 = arith.constant 0 : i32
    %c0_i32_0 = arith.constant 0 : i32
    %c0_i32_1 = arith.constant 0 : i32
    return %c0_i32, %c0_i32_0 : i32, i32
  }
  func.func @transform_2(%arg0: i32, %arg1: memref<4xf32, #tpu.memory_space<smem>>) -> (i32, i32) {
    %c0_i32 = arith.constant 0 : i32
    %c0_i32_0 = arith.constant 0 : i32
    %c0_i32_1 = arith.constant 0 : i32
    return %c0_i32, %c0_i32_0 : i32, i32
  }
  func.func @transform_3(%arg0: i32, %arg1: memref<4xf32, #tpu.memory_space<smem>>) -> (i32, i32) {
    %c0_i32 = arith.constant 0 : i32
    %c0_i32_0 = arith.constant 0 : i32
    %c0_i32_1 = arith.constant 0 : i32
    return %c0_i32, %c0_i32_0 : i32, i32
  }
}

</mosaic_0001>

<llo_original>
// kernel: tpu_custom_call.1
$region0: #{tpu_custom_call.1}
  #allocation0 [shape = 'u32[]', space=smem, size = 0x4, offset = 0x4, fixed_abs, tag = 'smem constant byte address 0x4 - core index']
  #allocation1 [shape = 'u32[144,128]{1,0:T(1,128)}', space=vmem, size = 0x12000, scoped, tag = 'internal scratch']
  #allocation2 [shape = 's32[1]{0}', space=sflag, size = 0x4, scoped, tag = 'scoped memory for tpu_custom_call.1']
  #allocation3 [shape = 'u8[512]{0}', space=smem, size = 0x200, scoped, tag = 'prefetched SMEM operand 0']
  %s0 = inlined_call_operand.vmem [shape: f32[4], index: 0, kind: input, shape index: {}]
  %s1 = inlined_call_operand.hbm [shape: f32[264,128], index: 1, kind: input, shape index: {}]
  %s2 = inlined_call_operand.vmem [shape: f32[16,32], index: 2, kind: input, shape index: {}]
  %s3 = inlined_call_operand.vmem [shape: f32[64,16], index: 3, kind: input, shape index: {}]
  %s4 = inlined_call_operand.hbm [shape: f32[16,32], index: 4, kind: output, shape index: {}]
  %s5 = sld [smem:[#allocation0]]
  $region26: #{tpu_custom_call.1} parent=0
    _
  %s7 = ssub.s32 1, %s5
  %s8 = scalar_select 0, %s7, %s5
  %s9 = sshll.u32 %s0, 4
  %s10 = int_to_ptr.vmem [resolvable:$true] %s9
  %12 = dma.vmem_to_smem %s10, 16, [#allocation3], [#allocation2]
  %13 = dma.done [#allocation2], 16
  %14 = sfence
  $region1: #{tpu_custom_call.1} parent=0
    #allocation4 [shape = 'u8[135168]{0}', space=vmem, size = 0x21000, scoped, tag = 'input window, operand 1, single buffered']
    #allocation5 [shape = 's32[1]{0}', space=sflag, size = 0x4, scoped, tag = 'scoped memory for tpu_custom_call.1']
    #allocation6 [shape = 's32[1]{0}', space=sflag, size = 0x4, scoped, tag = 'scoped memory for tpu_custom_call.1']
    #allocation7 [shape = 'u8[8192]{0}', space=vmem, size = 0x2000, scoped, tag = 'output window, operand 0, single buffered']
    %15 = vsyncpa [#allocation5], 0
    %16 = vsyncpa [#allocation6], 0
    // Predicated region
    $region2: #{tpu_custom_call.1} parent=1 // pred_check
      _
    $region3: #{tpu_custom_call.1} parent=1 // pred_check_branch
      %18 = sbr.rel (0) target = $region5
    $region4: #{tpu_custom_call.1} parent=1 // pred_region
      %s20 = ssub.s32 4224, 4224
      %21 = vsyncadd [#allocation5], %s20
      %s22 = sshll.u32 [#allocation4], 4
      %s23 = int_to_ptr.vmem [resolvable:$true] %s22
      %28 = dma.hbm_to_vmem [thread:$0]  %s1, 4224, %s23, [#allocation5], 128, 128, 8
    $region5: #{tpu_custom_call.1} parent=1 // pred_fallthru
      _
    // Predicated region
    $region6: #{tpu_custom_call.1} parent=1 // pred_check
      _
    $region7: #{tpu_custom_call.1} parent=1 // pred_check_branch
      %30 = sbr.rel (0) target = $region9
    $region8: #{tpu_custom_call.1} parent=1 // pred_region
      _
    $region9: #{tpu_custom_call.1} parent=1 // pred_fallthru
      _
    // Predicated region
    $region10: #{tpu_custom_call.1} parent=1 // pred_check
      _
    $region11: #{tpu_custom_call.1} parent=1 // pred_check_branch
      %32 = sbr.rel (0) target = $region13
    $region12: #{tpu_custom_call.1} parent=1 // pred_region
      _
    $region13: #{tpu_custom_call.1} parent=1 // pred_fallthru
      _
    // Predicated region
    $region14: #{tpu_custom_call.1} parent=1 // pred_check
      _
    $region15: #{tpu_custom_call.1} parent=1 // pred_check_branch
      %34 = sbr.rel (0) target = $region17
    $region16: #{tpu_custom_call.1} parent=1 // pred_region
      %35 = dma.done [#allocation5], 4224
    $region17: #{tpu_custom_call.1} parent=1 // pred_fallthru
      _
    %v36 = vld [vmem:[%s2] sm:$0xff]
    %v37 = vld [vmem:[%s2 + $0x8] sm:$0xff]
    %v38 = vld [vmem:[%s3] sm:$0xff]
    %v39 = vld [vmem:[%s3 + $0x8] sm:$0xff]
    %v40 = vld [vmem:[%s3 + $0x10] sm:$0xff]
    %v41 = vld [vmem:[%s3 + $0x18] sm:$0xff]
    %v42 = vld [vmem:[%s3 + $0x20] sm:$0xff]
    %v43 = vld [vmem:[%s3 + $0x28] sm:$0xff]
    %v44 = vld [vmem:[%s3 + $0x30] sm:$0xff]
    %v45 = vld [vmem:[%s3 + $0x38] sm:$0xff]
    %s46 = sld [smem:[#allocation3]]
    %s47 = sld [smem:[#allocation3 + $0x1]]
    %s48 = sld [smem:[#allocation3 + $0x2]]
    %s49 = sld [smem:[#allocation3 + $0x3]]
    %vm50 = vcmask 261120
    %v51 = vsel %vm50, %v36, 0.0
    %52 = vadd.xlane.f32.xlu0 %v51
    %v53 = vpop.xlane.xlu0 %52
    %v54 = vsel %vm50, %v37, 0.0
    %55 = vadd.xlane.f32.xlu0 %v54
    %v56 = vpop.xlane.xlu0 %55
    %v57 = vrcp.pop 32.0
    %v58 = vmul.f32 %v53, %v57
    %v59 = vmul.f32 %v56, %v57
    %v60 = vsub.f32 %v36, %v58
    %v61 = vsub.f32 %v37, %v59
    %v62 = vmul.f32 %v60, %v60
    %v63 = vmul.f32 %v61, %v61
    %v64 = vsel %vm50, %v62, 0.0
    %65 = vadd.xlane.f32.xlu0 %v64
    %v66 = vpop.xlane.xlu0 %65
    %v67 = vsel %vm50, %v63, 0.0
    %68 = vadd.xlane.f32.xlu0 %v67
    %v69 = vpop.xlane.xlu0 %68
    %v70 = vmul.f32 %v66, 0.032258064
    %v71 = vmul.f32 %v69, 0.032258064
    %v72 = vrsqrt.pop %v70
    %v73 = vmul.f32 %v70, %v72
    %vm74 = vcmp.eq.f32.partialorder %v70, inf
    %v75 = vsel %vm74, %v70, %v73
    %vm76 = vcmp.eq.f32.partialorder %v70, 0.0
    %v77 = vand.u32 %v70, 2147483648
    %v78 = vsel %vm76, %v77, %v75
    %v79 = vrsqrt.pop %v71
    %v80 = vmul.f32 %v71, %v79
    %vm81 = vcmp.eq.f32.partialorder %v71, inf
    %v82 = vsel %vm81, %v71, %v80
    %vm83 = vcmp.eq.f32.partialorder %v71, 0.0
    %v84 = vand.u32 %v71, 2147483648
    %v85 = vsel %vm83, %v84, %v82
    %v86 = vadd.f32 %v78, 1e-06
    %v87 = vadd.f32 %v85, 1e-06
    %v88 = vrcp.pop %v86
    %v89 = vrcp.pop %v87
    %v90 = vstv %s46
    %v91 = vmul.f32 %v90, %v60
    %v92 = vmul.f32 %v90, %v61
    %v93 = vmul.f32 %v91, %v88
    %v94 = vmul.f32 %v92, %v89
    %v95 = vstv %s47
    %v96 = vadd.f32 %v93, %v95
    %v97 = vadd.f32 %v94, %v95
    %v98 = vld [vmem:[#allocation4] sm:$0xff]
    %v99 = vld [vmem:[#allocation4 + $0x8] sm:$0xff]
    %v100 = vld [vmem:[#allocation4 + $0x10] sm:$0xff]
    %v101 = vld [vmem:[#allocation4 + $0x18] sm:$0xff]
    %v102 = vld [vmem:[#allocation4 + $0x20] sm:$0x1]
    %v103 = vlaneseq
    %v104 = vshrl.u32 %v103, 7
    %v105 = vsub.s32 0, %v104
    %v106 = vrot.slane %v102, %v105
    %v108 = vsel %vm50, %v96, 0
    %v111 = vsel %vm50, %v97, 0
    %113 = vmatprep.subr.mxu0 0.0
    %114 = vmatpush1.msra.mxu0 %v98
    %115 = vmatprep.subr.mxu0 0.0
    %116 = vmatpush1.msra.mxu0 %v99
    %117 = vmatprep.subr.mxu0 0.0
    %118 = vmatpush1.msra.mxu0 %v100
    %119 = vmatprep.subr.mxu0 0.0
    %120 = vmatpush1.msra.mxu0 %v101
    %121 = vmatprep.subr.mxu0 0.0
    %122 = vmatpush1.msra.mxu0 0.0
    %123 = vmatprep.subr.mxu0 0.0
    %124 = vmatpush1.msra.mxu0 0.0
    %125 = vmatprep.subr.mxu0 0.0
    %126 = vmatpush1.msra.mxu0 0.0
    %127 = vmatprep.subr.mxu0 0.0
    %128 = vmatpush1.msra.mxu0 0.0
    %129 = vmatprep.subr.mxu0 0.0
    %130 = vmatpush1.msra.mxu0 0.0
    %131 = vmatprep.subr.mxu0 0.0
    %132 = vmatpush1.msra.mxu0 0.0
    %133 = vmatprep.subr.mxu0 0.0
    %134 = vmatpush1.msra.mxu0 0.0
    %135 = vmatprep.subr.mxu0 0.0
    %136 = vmatpush1.msra.mxu0 0.0
    %137 = vmatprep.subr.mxu0 0.0
    %138 = vmatpush1.msra.mxu0 0.0
    %139 = vmatprep.subr.mxu0 0.0
    %140 = vmatpush1.msra.mxu0 0.0
    %141 = vmatprep.subr.mxu0 0.0
    %142 = vmatpush1.msra.mxu0 0.0
    %143 = vmatprep.subr.mxu0 0.0
    %144 = vmatpush1.msra.mxu0 0.0
    %145 = vmatprep.subr.mxu0 0.0
    %146 = vmatpush1.msra.mxu0 0.0
    %147 = vmatprep.subr.mxu0 0.0
    %148 = vmatpush1.msra.mxu0 0.0
    %149 = vmatprep.subr.mxu0 0.0
    %150 = vmatpush1.msra.mxu0 0.0
    %151 = vmatprep.subr.mxu0 0.0
    %152 = vmatpush1.msra.mxu0 0.0
    %153 = vmatprep.subr.mxu0 0.0
    %154 = vmatpush1.msra.mxu0 0.0
    %155 = vmatprep.subr.mxu0 0.0
    %156 = vmatpush1.msra.mxu0 0.0
    %157 = vmatprep.subr.mxu0 0.0
    %158 = vmatpush1.msra.mxu0 0.0
    %159 = vmatprep.subr.mxu0 0.0
    %160 = vmatpush1.msra.mxu0 0.0
    %161 = vmatprep.subr.mxu0 0.0
    %162 = vmatpush1.msra.mxu0 0.0
    %163 = vmatprep.subr.mxu0 0.0
    %164 = vmatpush1.msra.mxu0 0.0
    %165 = vmatprep.subr.mxu0 0.0
    %166 = vmatpush1.msra.mxu0 0.0
    %167 = vmatprep.subr.mxu0 0.0
    %168 = vmatpush1.msra.mxu0 0.0
    %169 = vmatprep.subr.mxu0 0.0
    %170 = vmatpush1.msra.mxu0 0.0
    %171 = vmatprep.subr.mxu0 0.0
    %172 = vmatpush1.msra.mxu0 0.0
    %173 = vmatprep.subr.mxu0 0.0
    %174 = vmatpush1.msra.mxu0 0.0
    %175 = vmatprep.subr.mxu0 0.0
    %176 = vmatpush1.msra.mxu0 0.0
    %177 = vmatprep.mubr.f32.mxu0 0.0
    %178 = vmatmul.mubr.f32.gmra.mrb[0].mxu0 %v108
    %v179 = vpop.f32.mrb[0].mxu0
    %v180 = vadd.f32 %v106, %v179
    %v181 = vpop.f32.mrb[0].mxu0
    %182 = vmatprep.mubr.f32.mxu0 0.0
    %183 = vmatmul.mubr.f32.gmra.mrb[0].mxu0 %v111
    %v184 = vpop.f32.mrb[0].mxu0
    %v185 = vadd.f32 %v106, %v184
    %v186 = vpop.f32.mrb[0].mxu0
    %187 = vdwg.mxu0
    %v188 = vld [vmem:[#allocation4 + $0x50] sm:$0xff]
    %v189 = vld [vmem:[#allocation4 + $0x58] sm:$0xff]
    %v190 = vld [vmem:[#allocation4 + $0x60] sm:$0xff]
    %v191 = vld [vmem:[#allocation4 + $0x68] sm:$0xff]
    %v192 = vld [vmem:[#allocation4 + $0x70] sm:$0x1]
    %v193 = vlaneseq
    %v194 = vshrl.u32 %v193, 7
    %v195 = vsub.s32 0, %v194
    %v196 = vrot.slane %v192, %v195
    %197 = vmatprep.subr.mxu0 0.0
    %198 = vmatpush1.msra.mxu0 %v188
    %199 = vmatprep.subr.mxu0 0.0
    %200 = vmatpush1.msra.mxu0 %v189
    %201 = vmatprep.subr.mxu0 0.0
    %202 = vmatpush1.msra.mxu0 %v190
    %203 = vmatprep.subr.mxu0 0.0
    %204 = vmatpush1.msra.mxu0 %v191
    %205 = vmatprep.subr.mxu0 0.0
    %206 = vmatpush1.msra.mxu0 0.0
    %207 = vmatprep.subr.mxu0 0.0
    %208 = vmatpush1.msra.mxu0 0.0
    %209 = vmatprep.subr.mxu0 0.0
    %210 = vmatpush1.msra.mxu0 0.0
    %211 = vmatprep.subr.mxu0 0.0
    %212 = vmatpush1.msra.mxu0 0.0
    %213 = vmatprep.subr.mxu0 0.0
    %214 = vmatpush1.msra.mxu0 0.0
    %215 = vmatprep.subr.mxu0 0.0
    %216 = vmatpush1.msra.mxu0 0.0
    %217 = vmatprep.subr.mxu0 0.0
    %218 = vmatpush1.msra.mxu0 0.0
    %219 = vmatprep.subr.mxu0 0.0
    %220 = vmatpush1.msra.mxu0 0.0
    %221 = vmatprep.subr.mxu0 0.0
    %222 = vmatpush1.msra.mxu0 0.0
    %223 = vmatprep.subr.mxu0 0.0
    %224 = vmatpush1.msra.mxu0 0.0
    %225 = vmatprep.subr.mxu0 0.0
    %226 = vmatpush1.msra.mxu0 0.0
    %227 = vmatprep.subr.mxu0 0.0
    %228 = vmatpush1.msra.mxu0 0.0
    %229 = vmatprep.subr.mxu0 0.0
    %230 = vmatpush1.msra.mxu0 0.0
    %231 = vmatprep.subr.mxu0 0.0
    %232 = vmatpush1.msra.mxu0 0.0
    %233 = vmatprep.subr.mxu0 0.0
    %234 = vmatpush1.msra.mxu0 0.0
    %235 = vmatprep.subr.mxu0 0.0
    %236 = vmatpush1.msra.mxu0 0.0
    %237 = vmatprep.subr.mxu0 0.0
    %238 = vmatpush1.msra.mxu0 0.0
    %239 = vmatprep.subr.mxu0 0.0
    %240 = vmatpush1.msra.mxu0 0.0
    %241 = vmatprep.subr.mxu0 0.0
    %242 = vmatpush1.msra.mxu0 0.0
    %243 = vmatprep.subr.mxu0 0.0
    %244 = vmatpush1.msra.mxu0 0.0
    %245 = vmatprep.subr.mxu0 0.0
    %246 = vmatpush1.msra.mxu0 0.0
    %247 = vmatprep.subr.mxu0 0.0
    %248 = vmatpush1.msra.mxu0 0.0
    %249 = vmatprep.subr.mxu0 0.0
    %250 = vmatpush1.msra.mxu0 0.0
    %251 = vmatprep.subr.mxu0 0.0
    %252 = vmatpush1.msra.mxu0 0.0
    %253 = vmatprep.subr.mxu0 0.0
    %254 = vmatpush1.msra.mxu0 0.0
    %255 = vmatprep.subr.mxu0 0.0
    %256 = vmatpush1.msra.mxu0 0.0
    %257 = vmatprep.subr.mxu0 0.0
    %258 = vmatpush1.msra.mxu0 0.0
    %259 = vmatprep.subr.mxu0 0.0
    %260 = vmatpush1.msra.mxu0 0.0
    %261 = vmatprep.mubr.f32.mxu0 0.0
    %262 = vmatmul.mubr.f32.gmra.mrb[0].mxu0 %v108
    %v263 = vpop.f32.mrb[0].mxu0
    %v264 = vadd.f32 %v196, %v263
    %v265 = vpop.f32.mrb[0].mxu0
    %266 = vmatprep.mubr.f32.mxu0 0.0
    %267 = vmatmul.mubr.f32.gmra.mrb[0].mxu0 %v111
    %v268 = vpop.f32.mrb[0].mxu0
    %v269 = vadd.f32 %v196, %v268
    %v270 = vpop.f32.mrb[0].mxu0
    %271 = vdwg.mxu0
    %v272 = vld [vmem:[#allocation4 + $0xc0] sm:$0xff]
    %v273 = vld [vmem:[#allocation4 + $0xc8] sm:$0xff]
    %v274 = vld [vmem:[#allocation4 + $0xd0] sm:$0xff]
    %v275 = vld [vmem:[#allocation4 + $0xd8] sm:$0xff]
    %v276 = vld [vmem:[#allocation4 + $0xe0] sm:$0xff]
    %v277 = vld [vmem:[#allocation4 + $0xe8] sm:$0xff]
    %v278 = vld [vmem:[#allocation4 + $0xf0] sm:$0xff]
    %v279 = vld [vmem:[#allocation4 + $0xf8] sm:$0xff]
    %v280 = vmul.f32 %v180, %v272
    %v281 = vmul.f32 %v185, %v273
    %v282 = vmul.f32 %v180, %v274
    %v283 = vmul.f32 %v185, %v275
    %v284 = vmul.f32 %v180, %v276
    %v285 = vmul.f32 %v185, %v277
    %v286 = vmul.f32 %v180, %v278
    %v287 = vmul.f32 %v185, %v279
    %290 = vrot.lane.b32.xlu0 %v180, 96
    %v291 = vpop.permute.xlu0 %290
    %292 = vrot.lane.b32.xlu0 %v185, 96
    %v293 = vpop.permute.xlu0 %292
    %v295 = vsel %vm50, %v280, 0
    %v298 = vsel %vm50, %v281, 0
    %v301 = vsel %vm50, %v282, 0
    %v304 = vsel %vm50, %v283, 0
    %v307 = vsel %vm50, %v284, 0
    %v310 = vsel %vm50, %v285, 0
    %v313 = vsel %vm50, %v286, 0
    %v316 = vsel %vm50, %v287, 0
    %v318 = vsel %vm50, %v291, 0
    %v320 = vsel %vm50, %v293, 0
    %322 = vmatprep.subr.mxu0 0.0
    %323 = vmatpush1.xpose.msra.mxu0 %v318
    %324 = vmatprep.subr.mxu0 0.0
    %325 = vmatpush1.xpose.msra.mxu0 %v320
    %326 = vmatprep.subr.mxu0 0.0
    %327 = vmatpush1.xpose.msra.mxu0 0.0
    %328 = vmatprep.subr.mxu0 0.0
    %329 = vmatpush1.xpose.msra.mxu0 0.0
    %330 = vmatprep.subr.mxu0 0.0
    %331 = vmatpush1.xpose.msra.mxu0 0.0
    %332 = vmatprep.subr.mxu0 0.0
    %333 = vmatpush1.xpose.msra.mxu0 0.0
    %334 = vmatprep.subr.mxu0 0.0
    %335 = vmatpush1.xpose.msra.mxu0 0.0
    %336 = vmatprep.subr.mxu0 0.0
    %337 = vmatpush1.xpose.msra.mxu0 0.0
    %338 = vmatprep.subr.mxu0 0.0
    %339 = vmatpush1.xpose.msra.mxu0 0.0
    %340 = vmatprep.subr.mxu0 0.0
    %341 = vmatpush1.xpose.msra.mxu0 0.0
    %342 = vmatprep.subr.mxu0 0.0
    %343 = vmatpush1.xpose.msra.mxu0 0.0
    %344 = vmatprep.subr.mxu0 0.0
    %345 = vmatpush1.xpose.msra.mxu0 0.0
    %346 = vmatprep.subr.mxu0 0.0
    %347 = vmatpush1.xpose.msra.mxu0 0.0
    %348 = vmatprep.subr.mxu0 0.0
    %349 = vmatpush1.xpose.msra.mxu0 0.0
    %350 = vmatprep.subr.mxu0 0.0
    %351 = vmatpush1.xpose.msra.mxu0 0.0
    %352 = vmatprep.subr.mxu0 0.0
    %353 = vmatpush1.xpose.msra.mxu0 0.0
    %354 = vmatprep.subr.mxu0 0.0
    %355 = vmatpush1.xpose.msra.mxu0 0.0
    %356 = vmatprep.subr.mxu0 0.0
    %357 = vmatpush1.xpose.msra.mxu0 0.0
    %358 = vmatprep.subr.mxu0 0.0
    %359 = vmatpush1.xpose.msra.mxu0 0.0
    %360 = vmatprep.subr.mxu0 0.0
    %361 = vmatpush1.xpose.msra.mxu0 0.0
    %362 = vmatprep.subr.mxu0 0.0
    %363 = vmatpush1.xpose.msra.mxu0 0.0
    %364 = vmatprep.subr.mxu0 0.0
    %365 = vmatpush1.xpose.msra.mxu0 0.0
    %366 = vmatprep.subr.mxu0 0.0
    %367 = vmatpush1.xpose.msra.mxu0 0.0
    %368 = vmatprep.subr.mxu0 0.0
    %369 = vmatpush1.xpose.msra.mxu0 0.0
    %370 = vmatprep.subr.mxu0 0.0
    %371 = vmatpush1.xpose.msra.mxu0 0.0
    %372 = vmatprep.subr.mxu0 0.0
    %373 = vmatpush1.xpose.msra.mxu0 0.0
    %374 = vmatprep.subr.mxu0 0.0
    %375 = vmatpush1.xpose.msra.mxu0 0.0
    %376 = vmatprep.subr.mxu0 0.0
    %377 = vmatpush1.xpose.msra.mxu0 0.0
    %378 = vmatprep.subr.mxu0 0.0
    %379 = vmatpush1.xpose.msra.mxu0 0.0
    %380 = vmatprep.subr.mxu0 0.0
    %381 = vmatpush1.xpose.msra.mxu0 0.0
    %382 = vmatprep.subr.mxu0 0.0
    %383 = vmatpush1.xpose.msra.mxu0 0.0
    %384 = vmatprep.subr.mxu0 0.0
    %385 = vmatpush1.xpose.msra.mxu0 0.0
    %386 = vmatprep.mubr.f32.mxu0 0.0
    %387 = vmatmul.mubr.f32.gmra.mrb[0].mxu0 %v295
    %v388 = vpop.f32.mrb[0].mxu0
    %v389 = vadd.f32 %v38, %v388
    %v390 = vpop.f32.mrb[0].mxu0
    %391 = vmatprep.mubr.f32.mxu0 0.0
    %392 = vmatmul.mubr.f32.gmra.mrb[0].mxu0 %v298
    %v393 = vpop.f32.mrb[0].mxu0
    %v394 = vadd.f32 %v39, %v393
    %v395 = vpop.f32.mrb[0].mxu0
    %396 = vmatprep.mubr.f32.mxu0 0.0
    %397 = vmatmul.mubr.f32.gmra.mrb[0].mxu0 %v301
    %v398 = vpop.f32.mrb[0].mxu0
    %v399 = vadd.f32 %v40, %v398
    %v400 = vpop.f32.mrb[0].mxu0
    %401 = vmatprep.mubr.f32.mxu0 0.0
    %402 = vmatmul.mubr.f32.gmra.mrb[0].mxu0 %v304
    %v403 = vpop.f32.mrb[0].mxu0
    %v404 = vadd.f32 %v41, %v403
    %v405 = vpop.f32.mrb[0].mxu0
    %406 = vmatprep.mubr.f32.mxu0 0.0
    %407 = vmatmul.mubr.f32.gmra.mrb[0].mxu0 %v307
    %v408 = vpop.f32.mrb[0].mxu0
    %v409 = vadd.f32 %v42, %v408
    %v410 = vpop.f32.mrb[0].mxu0
    %411 = vmatprep.mubr.f32.mxu0 0.0
    %412 = vmatmul.mubr.f32.gmra.mrb[0].mxu0 %v310
    %v413 = vpop.f32.mrb[0].mxu0
    %v414 = vadd.f32 %v43, %v413
    %v415 = vpop.f32.mrb[0].mxu0
    %416 = vmatprep.mubr.f32.mxu0 0.0
    %417 = vmatmul.mubr.f32.gmra.mrb[0].mxu0 %v313
    %v418 = vpop.f32.mrb[0].mxu0
    %v419 = vadd.f32 %v44, %v418
    %v420 = vpop.f32.mrb[0].mxu0
    %421 = vmatprep.mubr.f32.mxu0 0.0
    %422 = vmatmul.mubr.f32.gmra.mrb[0].mxu0 %v316
    %v423 = vpop.f32.mrb[0].mxu0
    %v424 = vadd.f32 %v45, %v423
    %v425 = vpop.f32.mrb[0].mxu0
    %426 = vdwg.mxu0
    %vm427 = vcmask 130048
    %v428 = vsel %vm427, %v389, -inf
    %429 = vmax.xlane.f32.xlu0 %v428
    %v430 = vpop.xlane.xlu0 %429
    %v431 = vsel %vm427, %v394, -inf
    %432 = vmax.xlane.f32.xlu0 %v431
    %v433 = vpop.xlane.xlu0 %432
    %v434 = vsel %vm427, %v399, -inf
    %435 = vmax.xlane.f32.xlu0 %v434
    %v436 = vpop.xlane.xlu0 %435
    %v437 = vsel %vm427, %v404, -inf
    %438 = vmax.xlane.f32.xlu0 %v437
    %v439 = vpop.xlane.xlu0 %438
    %v440 = vsel %vm427, %v409, -inf
    %441 = vmax.xlane.f32.xlu0 %v440
    %v442 = vpop.xlane.xlu0 %441
    %v443 = vsel %vm427, %v414, -inf
    %444 = vmax.xlane.f32.xlu0 %v443
    %v445 = vpop.xlane.xlu0 %444
    %v446 = vsel %vm427, %v419, -inf
    %447 = vmax.xlane.f32.xlu0 %v446
    %v448 = vpop.xlane.xlu0 %447
    %v449 = vsel %vm427, %v424, -inf
    %450 = vmax.xlane.f32.xlu0 %v449
    %v451 = vpop.xlane.xlu0 %450
    %v452 = vsub.f32 %v389, %v430
    %v453 = vsub.f32 %v394, %v433
    %v454 = vsub.f32 %v399, %v436
    %v455 = vsub.f32 %v404, %v439
    %v456 = vsub.f32 %v409, %v442
    %v457 = vsub.f32 %v414, %v445
    %v458 = vsub.f32 %v419, %v448
    %v459 = vsub.f32 %v424, %v451
    %v460 = vmul.f32 %v452, 1.442695
    %v461 = vpow.pop %v460
    %v462 = vmul.f32 %v453, 1.442695
    %v463 = vpow.pop %v462
    %v464 = vmul.f32 %v454, 1.442695
    %v465 = vpow.pop %v464
    %v466 = vmul.f32 %v455, 1.442695
    %v467 = vpow.pop %v466
    %v468 = vmul.f32 %v456, 1.442695
    %v469 = vpow.pop %v468
    %v470 = vmul.f32 %v457, 1.442695
    %v471 = vpow.pop %v470
    %v472 = vmul.f32 %v458, 1.442695
    %v473 = vpow.pop %v472
    %v474 = vmul.f32 %v459, 1.442695
    %v475 = vpow.pop %v474
    %v476 = vsel %vm427, %v461, 0.0
    %477 = vadd.xlane.f32.xlu0 %v476
    %v478 = vpop.xlane.xlu0 %477
    %v479 = vsel %vm427, %v463, 0.0
    %480 = vadd.xlane.f32.xlu0 %v479
    %v481 = vpop.xlane.xlu0 %480
    %v482 = vsel %vm427, %v465, 0.0
    %483 = vadd.xlane.f32.xlu0 %v482
    %v484 = vpop.xlane.xlu0 %483
    %v485 = vsel %vm427, %v467, 0.0
    %486 = vadd.xlane.f32.xlu0 %v485
    %v487 = vpop.xlane.xlu0 %486
    %v488 = vsel %vm427, %v469, 0.0
    %489 = vadd.xlane.f32.xlu0 %v488
    %v490 = vpop.xlane.xlu0 %489
    %v491 = vsel %vm427, %v471, 0.0
    %492 = vadd.xlane.f32.xlu0 %v491
    %v493 = vpop.xlane.xlu0 %492
    %v494 = vsel %vm427, %v473, 0.0
    %495 = vadd.xlane.f32.xlu0 %v494
    %v496 = vpop.xlane.xlu0 %495
    %v497 = vsel %vm427, %v475, 0.0
    %498 = vadd.xlane.f32.xlu0 %v497
    %v499 = vpop.xlane.xlu0 %498
    %v500 = vrcp.pop %v478
    %v501 = vrcp.pop %v481
    %v502 = vrcp.pop %v484
    %v503 = vrcp.pop %v487
    %v504 = vrcp.pop %v490
    %v505 = vrcp.pop %v493
    %v506 = vrcp.pop %v496
    %v507 = vrcp.pop %v499
    %v508 = vmul.f32 %v478, %v500
    %v509 = vmul.f32 %v481, %v501
    %v510 = vmul.f32 %v484, %v502
    %v511 = vmul.f32 %v487, %v503
    %v512 = vmul.f32 %v490, %v504
    %v513 = vmul.f32 %v493, %v505
    %v514 = vmul.f32 %v496, %v506
    %v515 = vmul.f32 %v499, %v507
    %v516 = vsub.f32 2.0, %v508
    %v517 = vsub.f32 2.0, %v509
    %v518 = vsub.f32 2.0, %v510
    %v519 = vsub.f32 2.0, %v511
    %v520 = vsub.f32 2.0, %v512
    %v521 = vsub.f32 2.0, %v513
    %v522 = vsub.f32 2.0, %v514
    %v523 = vsub.f32 2.0, %v515
    %v524 = vmul.f32 %v500, %v516
    %v525 = vmul.f32 %v501, %v517
    %v526 = vmul.f32 %v502, %v518
    %v527 = vmul.f32 %v503, %v519
    %v528 = vmul.f32 %v504, %v520
    %v529 = vmul.f32 %v505, %v521
    %v530 = vmul.f32 %v506, %v522
    %v531 = vmul.f32 %v507, %v523
    %v532 = vmul.f32 %v461, %v524
    %v533 = vmul.f32 %v463, %v525
    %v534 = vmul.f32 %v465, %v526
    %v535 = vmul.f32 %v467, %v527
    %v536 = vmul.f32 %v469, %v528
    %v537 = vmul.f32 %v471, %v529
    %v538 = vmul.f32 %v473, %v530
    %v539 = vmul.f32 %v475, %v531
    %v540 = vld [vmem:[#allocation4 + $0x100] sm:$0x1]
    %543 = vrot.lane.b32.xlu0 %v264, 96
    %v544 = vpop.permute.xlu0 %543
    %545 = vrot.lane.b32.xlu0 %v269, 96
    %v546 = vpop.permute.xlu0 %545
    %v550 = vsel %vm427, %v534, 0
    %v553 = vsel %vm427, %v535, 0
    %555 = vmatprep.subr.mxu0 0.0
    %556 = vmatpush1.msra.mxu0 %v544
    %557 = vmatprep.subr.mxu0 0.0
    %558 = vmatpush1.msra.mxu0 %v546
    %559 = vmatprep.subr.mxu0 0.0
    %560 = vmatpush1.msra.mxu0 0.0
    %561 = vmatprep.subr.mxu0 0.0
    %562 = vmatpush1.msra.mxu0 0.0
    %563 = vmatprep.subr.mxu0 0.0
    %564 = vmatpush1.msra.mxu0 0.0
    %565 = vmatprep.subr.mxu0 0.0
    %566 = vmatpush1.msra.mxu0 0.0
    %567 = vmatprep.subr.mxu0 0.0
    %568 = vmatpush1.msra.mxu0 0.0
    %569 = vmatprep.subr.mxu0 0.0
    %570 = vmatpush1.msra.mxu0 0.0
    %571 = vmatprep.subr.mxu0 0.0
    %572 = vmatpush1.msra.mxu0 0.0
    %573 = vmatprep.subr.mxu0 0.0
    %574 = vmatpush1.msra.mxu0 0.0
    %575 = vmatprep.subr.mxu0 0.0
    %576 = vmatpush1.msra.mxu0 0.0
    %577 = vmatprep.subr.mxu0 0.0
    %578 = vmatpush1.msra.mxu0 0.0
    %579 = vmatprep.subr.mxu0 0.0
    %580 = vmatpush1.msra.mxu0 0.0
    %581 = vmatprep.subr.mxu0 0.0
    %582 = vmatpush1.msra.mxu0 0.0
    %583 = vmatprep.subr.mxu0 0.0
    %584 = vmatpush1.msra.mxu0 0.0
    %585 = vmatprep.subr.mxu0 0.0
    %586 = vmatpush1.msra.mxu0 0.0
    %587 = vmatprep.subr.mxu0 0.0
    %588 = vmatpush1.msra.mxu0 0.0
    %589 = vmatprep.subr.mxu0 0.0
    %590 = vmatpush1.msra.mxu0 0.0
    %591 = vmatprep.subr.mxu0 0.0
    %592 = vmatpush1.msra.mxu0 0.0
    %593 = vmatprep.subr.mxu0 0.0
    %594 = vmatpush1.msra.mxu0 0.0
    %595 = vmatprep.subr.mxu0 0.0
    %596 = vmatpush1.msra.mxu0 0.0
    %597 = vmatprep.subr.mxu0 0.0
    %598 = vmatpush1.msra.mxu0 0.0
    %599 = vmatprep.subr.mxu0 0.0
    %600 = vmatpush1.msra.mxu0 0.0
    %601 = vmatprep.subr.mxu0 0.0
    %602 = vmatpush1.msra.mxu0 0.0
    %603 = vmatprep.subr.mxu0 0.0
    %604 = vmatpush1.msra.mxu0 0.0
    %605 = vmatprep.subr.mxu0 0.0
    %606 = vmatpush1.msra.mxu0 0.0
    %607 = vmatprep.subr.mxu0 0.0
    %608 = vmatpush1.msra.mxu0 0.0
    %609 = vmatprep.subr.mxu0 0.0
    %610 = vmatpush1.msra.mxu0 0.0
    %611 = vmatprep.subr.mxu0 0.0
    %612 = vmatpush1.msra.mxu0 0.0
    %613 = vmatprep.subr.mxu0 0.0
    %614 = vmatpush1.msra.mxu0 0.0
    %615 = vmatprep.subr.mxu0 0.0
    %616 = vmatpush1.msra.mxu0 0.0
    %617 = vmatprep.subr.mxu0 0.0
    %618 = vmatpush1.msra.mxu0 0.0
    %619 = vmatprep.mubr.f32.mxu0 0.0
    %620 = vmatmul.mubr.f32.gmra.mrb[0].mxu0 %v550
    %v621 = vpop.f32.mrb[0].mxu0
    %v622 = vadd.f32 0.0, %v621
    %v623 = vpop.f32.mrb[0].mxu0
    %624 = vmatprep.mubr.f32.mxu0 0.0
    %625 = vmatmul.mubr.f32.gmra.mrb[0].mxu0 %v553
    %v626 = vpop.f32.mrb[0].mxu0
    %v627 = vadd.f32 0.0, %v626
    %v628 = vpop.f32.mrb[0].mxu0
    %629 = vdwg.mxu0
    %630 = vrot.lane.b32.xlu0 %v264, 32
    %v631 = vpop.permute.xlu0 %630
    %632 = vrot.lane.b32.xlu0 %v269, 32
    %v633 = vpop.permute.xlu0 %632
    %v637 = vsel %vm427, %v538, 0
    %v640 = vsel %vm427, %v539, 0
    %642 = vmatprep.subr.mxu0 0.0
    %643 = vmatpush1.msra.mxu0 %v631
    %644 = vmatprep.subr.mxu0 0.0
    %645 = vmatpush1.msra.mxu0 %v633
    %646 = vmatprep.subr.mxu0 0.0
    %647 = vmatpush1.msra.mxu0 0.0
    %648 = vmatprep.subr.mxu0 0.0
    %649 = vmatpush1.msra.mxu0 0.0
    %650 = vmatprep.subr.mxu0 0.0
    %651 = vmatpush1.msra.mxu0 0.0
    %652 = vmatprep.subr.mxu0 0.0
    %653 = vmatpush1.msra.mxu0 0.0
    %654 = vmatprep.subr.mxu0 0.0
    %655 = vmatpush1.msra.mxu0 0.0
    %656 = vmatprep.subr.mxu0 0.0
    %657 = vmatpush1.msra.mxu0 0.0
    %658 = vmatprep.subr.mxu0 0.0
    %659 = vmatpush1.msra.mxu0 0.0
    %660 = vmatprep.subr.mxu0 0.0
    %661 = vmatpush1.msra.mxu0 0.0
    %662 = vmatprep.subr.mxu0 0.0
    %663 = vmatpush1.msra.mxu0 0.0
    %664 = vmatprep.subr.mxu0 0.0
    %665 = vmatpush1.msra.mxu0 0.0
    %666 = vmatprep.subr.mxu0 0.0
    %667 = vmatpush1.msra.mxu0 0.0
    %668 = vmatprep.subr.mxu0 0.0
    %669 = vmatpush1.msra.mxu0 0.0
    %670 = vmatprep.subr.mxu0 0.0
    %671 = vmatpush1.msra.mxu0 0.0
    %672 = vmatprep.subr.mxu0 0.0
    %673 = vmatpush1.msra.mxu0 0.0
    %674 = vmatprep.subr.mxu0 0.0
    %675 = vmatpush1.msra.mxu0 0.0
    %676 = vmatprep.subr.mxu0 0.0
    %677 = vmatpush1.msra.mxu0 0.0
    %678 = vmatprep.subr.mxu0 0.0
    %679 = vmatpush1.msra.mxu0 0.0
    %680 = vmatprep.subr.mxu0 0.0
    %681 = vmatpush1.msra.mxu0 0.0
    %682 = vmatprep.subr.mxu0 0.0
    %683 = vmatpush1.msra.mxu0 0.0
    %684 = vmatprep.subr.mxu0 0.0
    %685 = vmatpush1.msra.mxu0 0.0
    %686 = vmatprep.subr.mxu0 0.0
    %687 = vmatpush1.msra.mxu0 0.0
    %688 = vmatprep.subr.mxu0 0.0
    %689 = vmatpush1.msra.mxu0 0.0
    %690 = vmatprep.subr.mxu0 0.0
    %691 = vmatpush1.msra.mxu0 0.0
    %692 = vmatprep.subr.mxu0 0.0
    %693 = vmatpush1.msra.mxu0 0.0
    %694 = vmatprep.subr.mxu0 0.0
    %695 = vmatpush1.msra.mxu0 0.0
    %696 = vmatprep.subr.mxu0 0.0
    %697 = vmatpush1.msra.mxu0 0.0
    %698 = vmatprep.subr.mxu0 0.0
    %699 = vmatpush1.msra.mxu0 0.0
    %700 = vmatprep.subr.mxu0 0.0
    %701 = vmatpush1.msra.mxu0 0.0
    %702 = vmatprep.subr.mxu0 0.0
    %703 = vmatpush1.msra.mxu0 0.0
    %704 = vmatprep.subr.mxu0 0.0
    %705 = vmatpush1.msra.mxu0 0.0
    %706 = vmatprep.mubr.f32.mxu0 0.0
    %707 = vmatmul.mubr.f32.gmra.mrb[0].mxu0 %v637
    %v708 = vpop.f32.mrb[0].mxu0
    %v709 = vadd.f32 0.0, %v708
    %v710 = vpop.f32.mrb[0].mxu0
    %711 = vmatprep.mubr.f32.mxu0 0.0
    %712 = vmatmul.mubr.f32.gmra.mrb[0].mxu0 %v640
    %v713 = vpop.f32.mrb[0].mxu0
    %v714 = vadd.f32 0.0, %v713
    %v715 = vpop.f32.mrb[0].mxu0
    %716 = vdwg.mxu0
    %v718 = vsel %vm427, %v532, 0
    %v721 = vsel %vm427, %v533, 0
    %723 = vmatprep.subr.mxu0 0.0
    %724 = vmatpush1.msra.mxu0 %v264
    %725 = vmatprep.subr.mxu0 0.0
    %726 = vmatpush1.msra.mxu0 %v269
    %727 = vmatprep.subr.mxu0 0.0
    %728 = vmatpush1.msra.mxu0 0.0
    %729 = vmatprep.subr.mxu0 0.0
    %730 = vmatpush1.msra.mxu0 0.0
    %731 = vmatprep.subr.mxu0 0.0
    %732 = vmatpush1.msra.mxu0 0.0
    %733 = vmatprep.subr.mxu0 0.0
    %734 = vmatpush1.msra.mxu0 0.0
    %735 = vmatprep.subr.mxu0 0.0
    %736 = vmatpush1.msra.mxu0 0.0
    %737 = vmatprep.subr.mxu0 0.0
    %738 = vmatpush1.msra.mxu0 0.0
    %739 = vmatprep.subr.mxu0 0.0
    %740 = vmatpush1.msra.mxu0 0.0
    %741 = vmatprep.subr.mxu0 0.0
    %742 = vmatpush1.msra.mxu0 0.0
    %743 = vmatprep.subr.mxu0 0.0
    %744 = vmatpush1.msra.mxu0 0.0
    %745 = vmatprep.subr.mxu0 0.0
    %746 = vmatpush1.msra.mxu0 0.0
    %747 = vmatprep.subr.mxu0 0.0
    %748 = vmatpush1.msra.mxu0 0.0
    %749 = vmatprep.subr.mxu0 0.0
    %750 = vmatpush1.msra.mxu0 0.0
    %751 = vmatprep.subr.mxu0 0.0
    %752 = vmatpush1.msra.mxu0 0.0
    %753 = vmatprep.subr.mxu0 0.0
    %754 = vmatpush1.msra.mxu0 0.0
    %755 = vmatprep.subr.mxu0 0.0
    %756 = vmatpush1.msra.mxu0 0.0
    %757 = vmatprep.subr.mxu0 0.0
    %758 = vmatpush1.msra.mxu0 0.0
    %759 = vmatprep.subr.mxu0 0.0
    %760 = vmatpush1.msra.mxu0 0.0
    %761 = vmatprep.subr.mxu0 0.0
    %762 = vmatpush1.msra.mxu0 0.0
    %763 = vmatprep.subr.mxu0 0.0
    %764 = vmatpush1.msra.mxu0 0.0
    %765 = vmatprep.subr.mxu0 0.0
    %766 = vmatpush1.msra.mxu0 0.0
    %767 = vmatprep.subr.mxu0 0.0
    %768 = vmatpush1.msra.mxu0 0.0
    %769 = vmatprep.subr.mxu0 0.0
    %770 = vmatpush1.msra.mxu0 0.0
    %771 = vmatprep.subr.mxu0 0.0
    %772 = vmatpush1.msra.mxu0 0.0
    %773 = vmatprep.subr.mxu0 0.0
    %774 = vmatpush1.msra.mxu0 0.0
    %775 = vmatprep.subr.mxu0 0.0
    %776 = vmatpush1.msra.mxu0 0.0
    %777 = vmatprep.subr.mxu0 0.0
    %778 = vmatpush1.msra.mxu0 0.0
    %779 = vmatprep.subr.mxu0 0.0
    %780 = vmatpush1.msra.mxu0 0.0
    %781 = vmatprep.subr.mxu0 0.0
    %782 = vmatpush1.msra.mxu0 0.0
    %783 = vmatprep.subr.mxu0 0.0
    %784 = vmatpush1.msra.mxu0 0.0
    %785 = vmatprep.subr.mxu0 0.0
    %786 = vmatpush1.msra.mxu0 0.0
    %787 = vmatprep.mubr.f32.mxu0 0.0
    %788 = vmatmul.mubr.f32.gmra.mrb[0].mxu0 %v718
    %v789 = vpop.f32.mrb[0].mxu0
    %v790 = vadd.f32 %v622, %v789
    %v791 = vpop.f32.mrb[0].mxu0
    %792 = vmatprep.mubr.f32.mxu0 0.0
    %793 = vmatmul.mubr.f32.gmra.mrb[0].mxu0 %v721
    %v794 = vpop.f32.mrb[0].mxu0
    %v795 = vadd.f32 %v627, %v794
    %v796 = vpop.f32.mrb[0].mxu0
    %797 = vdwg.mxu0
    %798 = vrot.lane.b32.xlu0 %v264, 64
    %v799 = vpop.permute.xlu0 %798
    %800 = vrot.lane.b32.xlu0 %v269, 64
    %v801 = vpop.permute.xlu0 %800
    %v805 = vsel %vm427, %v536, 0
    %v808 = vsel %vm427, %v537, 0
    %810 = vmatprep.subr.mxu0 0.0
    %811 = vmatpush1.msra.mxu0 %v799
    %812 = vmatprep.subr.mxu0 0.0
    %813 = vmatpush1.msra.mxu0 %v801
    %814 = vmatprep.subr.mxu0 0.0
    %815 = vmatpush1.msra.mxu0 0.0
    %816 = vmatprep.subr.mxu0 0.0
    %817 = vmatpush1.msra.mxu0 0.0
    %818 = vmatprep.subr.mxu0 0.0
    %819 = vmatpush1.msra.mxu0 0.0
    %820 = vmatprep.subr.mxu0 0.0
    %821 = vmatpush1.msra.mxu0 0.0
    %822 = vmatprep.subr.mxu0 0.0
    %823 = vmatpush1.msra.mxu0 0.0
    %824 = vmatprep.subr.mxu0 0.0
    %825 = vmatpush1.msra.mxu0 0.0
    %826 = vmatprep.subr.mxu0 0.0
    %827 = vmatpush1.msra.mxu0 0.0
    %828 = vmatprep.subr.mxu0 0.0
    %829 = vmatpush1.msra.mxu0 0.0
    %830 = vmatprep.subr.mxu0 0.0
    %831 = vmatpush1.msra.mxu0 0.0
    %832 = vmatprep.subr.mxu0 0.0
    %833 = vmatpush1.msra.mxu0 0.0
    %834 = vmatprep.subr.mxu0 0.0
    %835 = vmatpush1.msra.mxu0 0.0
    %836 = vmatprep.subr.mxu0 0.0
    %837 = vmatpush1.msra.mxu0 0.0
    %838 = vmatprep.subr.mxu0 0.0
    %839 = vmatpush1.msra.mxu0 0.0
    %840 = vmatprep.subr.mxu0 0.0
    %841 = vmatpush1.msra.mxu0 0.0
    %842 = vmatprep.subr.mxu0 0.0
    %843 = vmatpush1.msra.mxu0 0.0
    %844 = vmatprep.subr.mxu0 0.0
    %845 = vmatpush1.msra.mxu0 0.0
    %846 = vmatprep.subr.mxu0 0.0
    %847 = vmatpush1.msra.mxu0 0.0
    %848 = vmatprep.subr.mxu0 0.0
    %849 = vmatpush1.msra.mxu0 0.0
    %850 = vmatprep.subr.mxu0 0.0
    %851 = vmatpush1.msra.mxu0 0.0
    %852 = vmatprep.subr.mxu0 0.0
    %853 = vmatpush1.msra.mxu0 0.0
    %854 = vmatprep.subr.mxu0 0.0
    %855 = vmatpush1.msra.mxu0 0.0
    %856 = vmatprep.subr.mxu0 0.0
    %857 = vmatpush1.msra.mxu0 0.0
    %858 = vmatprep.subr.mxu0 0.0
    %859 = vmatpush1.msra.mxu0 0.0
    %860 = vmatprep.subr.mxu0 0.0
    %861 = vmatpush1.msra.mxu0 0.0
    %862 = vmatprep.subr.mxu0 0.0
    %863 = vmatpush1.msra.mxu0 0.0
    %864 = vmatprep.subr.mxu0 0.0
    %865 = vmatpush1.msra.mxu0 0.0
    %866 = vmatprep.subr.mxu0 0.0
    %867 = vmatpush1.msra.mxu0 0.0
    %868 = vmatprep.subr.mxu0 0.0
    %869 = vmatpush1.msra.mxu0 0.0
    %870 = vmatprep.subr.mxu0 0.0
    %871 = vmatpush1.msra.mxu0 0.0
    %872 = vmatprep.subr.mxu0 0.0
    %873 = vmatpush1.msra.mxu0 0.0
    %874 = vmatprep.mubr.f32.mxu0 0.0
    %875 = vmatmul.mubr.f32.gmra.mrb[0].mxu0 %v805
    %v876 = vpop.f32.mrb[0].mxu0
    %v877 = vadd.f32 %v709, %v876
    %v878 = vpop.f32.mrb[0].mxu0
    %879 = vmatprep.mubr.f32.mxu0 0.0
    %880 = vmatmul.mubr.f32.gmra.mrb[0].mxu0 %v808
    %v881 = vpop.f32.mrb[0].mxu0
    %v882 = vadd.f32 %v714, %v881
    %v883 = vpop.f32.mrb[0].mxu0
    %884 = vdwg.mxu0
    %v885 = vadd.f32 %v790, %v877
    %v886 = vadd.f32 %v795, %v882
    %v887 = vlaneseq
    %v888 = vshrl.u32 %v887, 7
    %v889 = vsub.s32 0, %v888
    %v890 = vrot.slane %v540, %v889
    %v891 = vadd.f32 %v885, %v890
    %v892 = vadd.f32 %v886, %v890
    %v893 = vadd.f32 %v36, %v891
    %v894 = vadd.f32 %v37, %v892
    %v895 = vsel %vm50, %v893, 0.0
    %896 = vadd.xlane.f32.xlu0 %v895
    %v897 = vpop.xlane.xlu0 %896
    %v898 = vsel %vm50, %v894, 0.0
    %899 = vadd.xlane.f32.xlu0 %v898
    %v900 = vpop.xlane.xlu0 %899
    %v901 = vmul.f32 %v897, %v57
    %v902 = vmul.f32 %v900, %v57
    %v903 = vsub.f32 %v893, %v901
    %v904 = vsub.f32 %v894, %v902
    %v905 = vmul.f32 %v903, %v903
    %v906 = vmul.f32 %v904, %v904
    %v907 = vsel %vm50, %v905, 0.0
    %908 = vadd.xlane.f32.xlu0 %v907
    %v909 = vpop.xlane.xlu0 %908
    %v910 = vsel %vm50, %v906, 0.0
    %911 = vadd.xlane.f32.xlu0 %v910
    %v912 = vpop.xlane.xlu0 %911
    %v913 = vmul.f32 %v909, 0.032258064
    %v914 = vmul.f32 %v912, 0.032258064
    %v915 = vrsqrt.pop %v913
    %v916 = vmul.f32 %v913, %v915
    %vm917 = vcmp.eq.f32.partialorder %v913, inf
    %v918 = vsel %vm917, %v913, %v916
    %vm919 = vcmp.eq.f32.partialorder %v913, 0.0
    %v920 = vand.u32 %v913, 2147483648
    %v921 = vsel %vm919, %v920, %v918
    %v922 = vrsqrt.pop %v914
    %v923 = vmul.f32 %v914, %v922
    %vm924 = vcmp.eq.f32.partialorder %v914, inf
    %v925 = vsel %vm924, %v914, %v923
    %vm926 = vcmp.eq.f32.partialorder %v914, 0.0
    %v927 = vand.u32 %v914, 2147483648
    %v928 = vsel %vm926, %v927, %v925
    %v929 = vadd.f32 %v921, 1e-06
    %v930 = vadd.f32 %v928, 1e-06
    %v931 = vrcp.pop %v929
    %v932 = vrcp.pop %v930
    %v933 = vstv %s48
    %v934 = vmul.f32 %v933, %v903
    %v935 = vmul.f32 %v933, %v904
    %v936 = vmul.f32 %v934, %v931
    %v937 = vmul.f32 %v935, %v932
    %v938 = vstv %s49
    %v939 = vadd.f32 %v936, %v938
    %v940 = vadd.f32 %v937, %v938
    %v941 = vld [vmem:[#allocation4 + $0x28] sm:$0xff]
    %v942 = vld [vmem:[#allocation4 + $0x30] sm:$0xff]
    %v943 = vld [vmem:[#allocation4 + $0x38] sm:$0xff]
    %v944 = vld [vmem:[#allocation4 + $0x40] sm:$0xff]
    %v945 = vld [vmem:[#allocation4 + $0x48] sm:$0x1]
    %v946 = vlaneseq
    %v947 = vshrl.u32 %v946, 7
    %v948 = vsub.s32 0, %v947
    %v949 = vrot.slane %v945, %v948
    %v951 = vsel %vm50, %v939, 0
    %v954 = vsel %vm50, %v940, 0
    %956 = vmatprep.subr.mxu0 0.0
    %957 = vmatpush1.msra.mxu0 %v941
    %958 = vmatprep.subr.mxu0 0.0
    %959 = vmatpush1.msra.mxu0 %v942
    %960 = vmatprep.subr.mxu0 0.0
    %961 = vmatpush1.msra.mxu0 %v943
    %962 = vmatprep.subr.mxu0 0.0
    %963 = vmatpush1.msra.mxu0 %v944
    %964 = vmatprep.subr.mxu0 0.0
    %965 = vmatpush1.msra.mxu0 0.0
    %966 = vmatprep.subr.mxu0 0.0
    %967 = vmatpush1.msra.mxu0 0.0
    %968 = vmatprep.subr.mxu0 0.0
    %969 = vmatpush1.msra.mxu0 0.0
    %970 = vmatprep.subr.mxu0 0.0
    %971 = vmatpush1.msra.mxu0 0.0
    %972 = vmatprep.subr.mxu0 0.0
    %973 = vmatpush1.msra.mxu0 0.0
    %974 = vmatprep.subr.mxu0 0.0
    %975 = vmatpush1.msra.mxu0 0.0
    %976 = vmatprep.subr.mxu0 0.0
    %977 = vmatpush1.msra.mxu0 0.0
    %978 = vmatprep.subr.mxu0 0.0
    %979 = vmatpush1.msra.mxu0 0.0
    %980 = vmatprep.subr.mxu0 0.0
    %981 = vmatpush1.msra.mxu0 0.0
    %982 = vmatprep.subr.mxu0 0.0
    %983 = vmatpush1.msra.mxu0 0.0
    %984 = vmatprep.subr.mxu0 0.0
    %985 = vmatpush1.msra.mxu0 0.0
    %986 = vmatprep.subr.mxu0 0.0
    %987 = vmatpush1.msra.mxu0 0.0
    %988 = vmatprep.subr.mxu0 0.0
    %989 = vmatpush1.msra.mxu0 0.0
    %990 = vmatprep.subr.mxu0 0.0
    %991 = vmatpush1.msra.mxu0 0.0
    %992 = vmatprep.subr.mxu0 0.0
    %993 = vmatpush1.msra.mxu0 0.0
    %994 = vmatprep.subr.mxu0 0.0
    %995 = vmatpush1.msra.mxu0 0.0
    %996 = vmatprep.subr.mxu0 0.0
    %997 = vmatpush1.msra.mxu0 0.0
    %998 = vmatprep.subr.mxu0 0.0
    %999 = vmatpush1.msra.mxu0 0.0
    %1000 = vmatprep.subr.mxu0 0.0
    %1001 = vmatpush1.msra.mxu0 0.0
    %1002 = vmatprep.subr.mxu0 0.0
    %1003 = vmatpush1.msra.mxu0 0.0
    %1004 = vmatprep.subr.mxu0 0.0
    %1005 = vmatpush1.msra.mxu0 0.0
    %1006 = vmatprep.subr.mxu0 0.0
    %1007 = vmatpush1.msra.mxu0 0.0
    %1008 = vmatprep.subr.mxu0 0.0
    %1009 = vmatpush1.msra.mxu0 0.0
    %1010 = vmatprep.subr.mxu0 0.0
    %1011 = vmatpush1.msra.mxu0 0.0
    %1012 = vmatprep.subr.mxu0 0.0
    %1013 = vmatpush1.msra.mxu0 0.0
    %1014 = vmatprep.subr.mxu0 0.0
    %1015 = vmatpush1.msra.mxu0 0.0
    %1016 = vmatprep.subr.mxu0 0.0
    %1017 = vmatpush1.msra.mxu0 0.0
    %1018 = vmatprep.subr.mxu0 0.0
    %1019 = vmatpush1.msra.mxu0 0.0
    %1020 = vmatprep.mubr.f32.mxu0 0.0
    %1021 = vmatmul.mubr.f32.gmra.mrb[0].mxu0 %v951
    %v1022 = vpop.f32.mrb[0].mxu0
    %v1023 = vadd.f32 %v949, %v1022
    %v1024 = vpop.f32.mrb[0].mxu0
    %1025 = vmatprep.mubr.f32.mxu0 0.0
    %1026 = vmatmul.mubr.f32.gmra.mrb[0].mxu0 %v954
    %v1027 = vpop.f32.mrb[0].mxu0
    %v1028 = vadd.f32 %v949, %v1027
    %v1029 = vpop.f32.mrb[0].mxu0
    %1030 = vdwg.mxu0
    %v1031 = vmax.f32 %v1023, 0.0
    %v1032 = vmax.f32 %v1028, 0.0
    %v1033 = vld [vmem:[#allocation4 + $0x78] sm:$0xff]
    %v1034 = vld [vmem:[#allocation4 + $0x80] sm:$0xff]
    %v1035 = vld [vmem:[#allocation4 + $0x88] sm:$0xff]
    %v1036 = vld [vmem:[#allocation4 + $0x90] sm:$0xff]
    %v1037 = vld [vmem:[#allocation4 + $0x98] sm:$0xff]
    %v1038 = vld [vmem:[#allocation4 + $0xa0] sm:$0xff]
    %v1039 = vld [vmem:[#allocation4 + $0xa8] sm:$0xff]
    %v1040 = vld [vmem:[#allocation4 + $0xb0] sm:$0xff]
    %v1041 = vld [vmem:[#allocation4 + $0xb8] sm:$0x1]
    %v1042 = vlaneseq
    %v1043 = vshrl.u32 %v1042, 7
    %v1044 = vsub.s32 0, %v1043
    %v1045 = vrot.slane %v1041, %v1044
    %vm1046 = vcmask 523264
    %v1048 = vsel %vm1046, %v1031, 0
    %v1051 = vsel %vm1046, %v1032, 0
    %1053 = vmatprep.subr.mxu0 0.0
    %1054 = vmatpush1.msra.mxu0 %v1033
    %1055 = vmatprep.subr.mxu0 0.0
    %1056 = vmatpush1.msra.mxu0 %v1034
    %1057 = vmatprep.subr.mxu0 0.0
    %1058 = vmatpush1.msra.mxu0 %v1035
    %1059 = vmatprep.subr.mxu0 0.0
    %1060 = vmatpush1.msra.mxu0 %v1036
    %1061 = vmatprep.subr.mxu0 0.0
    %1062 = vmatpush1.msra.mxu0 %v1037
    %1063 = vmatprep.subr.mxu0 0.0
    %1064 = vmatpush1.msra.mxu0 %v1038
    %1065 = vmatprep.subr.mxu0 0.0
    %1066 = vmatpush1.msra.mxu0 %v1039
    %1067 = vmatprep.subr.mxu0 0.0
    %1068 = vmatpush1.msra.mxu0 %v1040
    %1069 = vmatprep.subr.mxu0 0.0
    %1070 = vmatpush1.msra.mxu0 0.0
    %1071 = vmatprep.subr.mxu0 0.0
    %1072 = vmatpush1.msra.mxu0 0.0
    %1073 = vmatprep.subr.mxu0 0.0
    %1074 = vmatpush1.msra.mxu0 0.0
    %1075 = vmatprep.subr.mxu0 0.0
    %1076 = vmatpush1.msra.mxu0 0.0
    %1077 = vmatprep.subr.mxu0 0.0
    %1078 = vmatpush1.msra.mxu0 0.0
    %1079 = vmatprep.subr.mxu0 0.0
    %1080 = vmatpush1.msra.mxu0 0.0
    %1081 = vmatprep.subr.mxu0 0.0
    %1082 = vmatpush1.msra.mxu0 0.0
    %1083 = vmatprep.subr.mxu0 0.0
    %1084 = vmatpush1.msra.mxu0 0.0
    %1085 = vmatprep.subr.mxu0 0.0
    %1086 = vmatpush1.msra.mxu0 0.0
    %1087 = vmatprep.subr.mxu0 0.0
    %1088 = vmatpush1.msra.mxu0 0.0
    %1089 = vmatprep.subr.mxu0 0.0
    %1090 = vmatpush1.msra.mxu0 0.0
    %1091 = vmatprep.subr.mxu0 0.0
    %1092 = vmatpush1.msra.mxu0 0.0
    %1093 = vmatprep.subr.mxu0 0.0
    %1094 = vmatpush1.msra.mxu0 0.0
    %1095 = vmatprep.subr.mxu0 0.0
    %1096 = vmatpush1.msra.mxu0 0.0
    %1097 = vmatprep.subr.mxu0 0.0
    %1098 = vmatpush1.msra.mxu0 0.0
    %1099 = vmatprep.subr.mxu0 0.0
    %1100 = vmatpush1.msra.mxu0 0.0
    %1101 = vmatprep.subr.mxu0 0.0
    %1102 = vmatpush1.msra.mxu0 0.0
    %1103 = vmatprep.subr.mxu0 0.0
    %1104 = vmatpush1.msra.mxu0 0.0
    %1105 = vmatprep.subr.mxu0 0.0
    %1106 = vmatpush1.msra.mxu0 0.0
    %1107 = vmatprep.subr.mxu0 0.0
    %1108 = vmatpush1.msra.mxu0 0.0
    %1109 = vmatprep.subr.mxu0 0.0
    %1110 = vmatpush1.msra.mxu0 0.0
    %1111 = vmatprep.subr.mxu0 0.0
    %1112 = vmatpush1.msra.mxu0 0.0
    %1113 = vmatprep.subr.mxu0 0.0
    %1114 = vmatpush1.msra.mxu0 0.0
    %1115 = vmatprep.subr.mxu0 0.0
    %1116 = vmatpush1.msra.mxu0 0.0
    %1117 = vmatprep.mubr.f32.mxu0 0.0
    %1118 = vmatmul.mubr.f32.gmra.mrb[0].mxu0 %v1048
    %v1119 = vpop.f32.mrb[0].mxu0
    %v1120 = vadd.f32 %v1045, %v1119
    %v1121 = vpop.f32.mrb[0].mxu0
    %1122 = vmatprep.mubr.f32.mxu0 0.0
    %1123 = vmatmul.mubr.f32.gmra.mrb[0].mxu0 %v1051
    %v1124 = vpop.f32.mrb[0].mxu0
    %v1125 = vadd.f32 %v1045, %v1124
    %v1126 = vpop.f32.mrb[0].mxu0
    %1127 = vdwg.mxu0
    %v1128 = vadd.f32 %v893, %v1120
    %v1129 = vadd.f32 %v894, %v1125
    %1130 = vst.msk [vmem:[#allocation7] sm:$0xff] %vm50, %v1128
    %1131 = vst.msk [vmem:[#allocation7 + $0x8] sm:$0xff] %vm50, %v1129
    // Predicated region
    $region18: #{tpu_custom_call.1} parent=1 // pred_check
      _
    $region19: #{tpu_custom_call.1} parent=1 // pred_check_branch
      %1133 = sbr.rel (0) target = $region21
    $region20: #{tpu_custom_call.1} parent=1 // pred_region
      %s1135 = ssub.s32 256, 256
      %1136 = vsyncadd [#allocation6], %s1135
      %s1137 = sshll.u32 [#allocation7], 4
      %s1138 = int_to_ptr.vmem [resolvable:$true] %s1137
      %1143 = dma.vmem_to_hbm [thread:$0]  %s1138, 256, %s4, [#allocation6], 128, 128, 8
    $region21: #{tpu_custom_call.1} parent=1 // pred_fallthru
      _
    // Predicated region
    $region22: #{tpu_custom_call.1} parent=1 // pred_check
      _
    $region23: #{tpu_custom_call.1} parent=1 // pred_check_branch
      %1145 = sbr.rel (0) target = $region25
    $region24: #{tpu_custom_call.1} parent=1 // pred_region
      %1146 = dma.done [#allocation6], 256
    $region25: #{tpu_custom_call.1} parent=1 // pred_fallthru
      _
    %1147 = vsyncpa [#allocation5], 1
    %1148 = vsyncpa [#allocation6], 1

</llo_original>
